<compile_context>
chip_gen: v5e
topology: v5e:2x2
jax: 0.10.0
libtpu: 0.0.40
codegen_flags: <defaults>
</compile_context>

<pallas_src>
import functools

import jax
import jax.numpy as jnp
from jax.experimental import pallas as pl
from jax.experimental.pallas import tpu as pltpu


def _round_up(x, m):
    return (x + m - 1) // m * m


def _choose_k_tile(Hp, Kp, budget_bytes=16 * 1024 * 1024):
    """Largest K-tile (multiple of 128 that divides Kp) whose double-buffered
    int8 weight block (tk, 4*Hp) fits within budget_bytes of VMEM."""
    G = 4 * Hp
    for nk in range(1, Kp // 128 + 1):
        if Kp % nk:
            continue
        tk = Kp // nk
        if tk % 128:
            continue
        if 2 * tk * G <= budget_bytes:  # int8: 1 byte/elem, 2 pipeline buffers
            return tk
    return 128


def _stacked_lstm_kernel(Hp, tk, xg0_ref, h0_ref, c0_ref, w_ref, scale_ref,
                         b_ref, h1_ref, c1_ref, xh_ref, acc_ref):
    """Grid = (layer, k_tile).  One layer == one LSTMCell (single time step).

    xg0_ref  : (Bp, 4*Hp)  f32   precomputed layer-0 input gates x0 @ W_ih[0]^T
    h0_ref   : (Bp, Hp)    bf16  this layer's initial hidden state
    c0_ref   : (Bp, Hp)    f32   this layer's initial cell state
    w_ref    : (tk, 4*Hp)  int8  K-tile of stacked [W_ih^T ; W_hh^T], gates (i,f,o,g)
    scale_ref: (1, 4*Hp)   f32   per-output-column dequant scale
    b_ref    : (1, 4*Hp)   f32   combined bias (b_ih + b_hh)
    h1_ref   : (Bp, Hp)    bf16  new hidden state (output)
    c1_ref   : (Bp, Hp)    f32   new cell state (output)
    xh_ref   : (Bp, 2*Hp)  bf16  persistent [x | h] slab (carried across layers)
    acc_ref  : (Bp, 4*Hp)  f32   gate accumulator (carried across K tiles)
    """
    layer = pl.program_id(0)
    kstep = pl.program_id(1)
    nk = pl.num_programs(1)

    # Layer 0 only: the x half of the slab is mathematically unused (its weight
    # rows are zero and the input contribution arrives via xg0), but it must
    # hold a defined value so stale VMEM bits cannot turn into NaNs.
    @pl.when(jnp.logical_and(layer == 0, kstep == 0))
    def _():
        xh_ref[:, :Hp] = jnp.zeros((xh_ref.shape[0], Hp), dtype=xh_ref.dtype)

    @pl.when(kstep == 0)
    def _():
        # This layer's recurrent hidden state -> second half of the slab.
        xh_ref[:, Hp:] = h0_ref[...]
        acc_ref[...] = jnp.zeros_like(acc_ref)

    # One K-tile of the fused matmul: [x | h][:, koff:koff+tk] @ W-tile.
    # int8 weights are upcast to bf16 on the VPU (exact: |w| <= 127); the MXU
    # runs bf16 x bf16 with f32 accumulation.
    koff = pl.multiple_of(kstep * tk, 128)
    w_bf16 = w_ref[...].astype(jnp.float32).astype(jnp.bfloat16)
    acc_ref[...] += jnp.dot(xh_ref[:, pl.ds(koff, tk)], w_bf16,
                            preferred_element_type=jnp.float32)

    @pl.when(kstep == nk - 1)
    def _():
        is_l0 = (layer == 0).astype(jnp.float32)
        # Per-column dequant scale on the f32 accumulator + combined bias
        # + (layer 0 only) the precomputed input-path gates.
        gates = acc_ref[...] * scale_ref[...] + b_ref[...] + is_l0 * xg0_ref[...]

        # Gate order (i, f, o, g): one wide sigmoid over 3*Hp lanes, one tanh.
        ifo = jax.nn.sigmoid(gates[:, :3 * Hp])
        g_g = jnp.tanh(gates[:, 3 * Hp:])
        i_g = ifo[:, 0 * Hp:1 * Hp]
        f_g = ifo[:, 1 * Hp:2 * Hp]
        o_g = ifo[:, 2 * Hp:3 * Hp]

        c_new = f_g * c0_ref[...] + i_g * g_g
        h_new = o_g * jnp.tanh(c_new)

        h1_ref[...] = h_new.astype(h1_ref.dtype)
        c1_ref[...] = c_new.astype(c1_ref.dtype)
        # Carry this layer's h as the next layer's x (dropout == identity).
        xh_ref[:, :Hp] = h_new.astype(xh_ref.dtype)


def _stacked_lstm_pallas(xg0, h0, c0, w_q, w_scale, b_all):
    L, Bp, Hp = h0.shape
    Kp = w_q.shape[1]          # == 2 * Hp
    G = 4 * Hp
    tk = _choose_k_tile(Hp, Kp)
    nk = Kp // tk

    # Explicit VMEM budget: double-buffered in/out blocks + persistent scratch.
    vmem_bytes = (
        2 * tk * G * 1            # int8 weight K-tile, double-buffered
        + 2 * Bp * G * 4          # xg0 (resident block, counted x2 for safety)
        + 2 * 8 * G * 4           # per-column scale (padded to 8 sublanes)
        + 2 * 8 * G * 4           # bias
        + 2 * Bp * Hp * 2         # h0 (bf16)
        + 2 * Bp * Hp * 4         # c0 (f32)
        + 2 * Bp * Hp * 2         # h1 (bf16)
        + 2 * Bp * Hp * 4         # c1 (f32)
        + Bp * Kp * 2             # [x|h] slab scratch (bf16)
        + Bp * G * 4              # f32 gate accumulator scratch
    )
    vmem_bytes = min(int(vmem_bytes * 1.25) + (2 << 20), 64 * 1024 * 1024)

    kernel = functools.partial(_stacked_lstm_kernel, Hp, tk)
    return pl.pallas_call(
        kernel,
        out_shape=(jax.ShapeDtypeStruct((L, Bp, Hp), jnp.bfloat16),
                   jax.ShapeDtypeStruct((L, Bp, Hp), jnp.float32)),
        grid_spec=pltpu.PrefetchScalarGridSpec(
            num_scalar_prefetch=0,
            grid=(L, nk),
            in_specs=[
                pl.BlockSpec((Bp, G), lambda l, k: (0, 0)),              # xg0
                pl.BlockSpec((None, Bp, Hp), lambda l, k: (l, 0, 0)),    # h0[l]
                pl.BlockSpec((None, Bp, Hp), lambda l, k: (l, 0, 0)),    # c0[l]
                pl.BlockSpec((None, tk, G), lambda l, k: (l, k, 0)),     # W_q[l, k]
                pl.BlockSpec((None, 1, G), lambda l, k: (l, 0, 0)),      # scale[l]
                pl.BlockSpec((None, 1, G), lambda l, k: (l, 0, 0)),      # bias[l]
            ],
            out_specs=(pl.BlockSpec((None, Bp, Hp), lambda l, k: (l, 0, 0)),
                       pl.BlockSpec((None, Bp, Hp), lambda l, k: (l, 0, 0))),
            scratch_shapes=[pltpu.VMEM((Bp, Kp), jnp.bfloat16),
                            pltpu.VMEM((Bp, G), jnp.float32)],
        ),
        compiler_params=pltpu.CompilerParams(
            # Both axes are true sequential dependencies: the layer axis carries
            # the [x|h] slab, the K axis carries the gate accumulator.
            dimension_semantics=("arbitrary", "arbitrary"),
            vmem_limit_bytes=vmem_bytes),
    )(xg0, h0, c0, w_q, w_scale, b_all)


def init_stacked_lstm_params(key, num_layers, input_dim, hidden_dim,
                             dtype=jnp.float32):
    """Deterministic PyTorch-style LSTMCell init: U(-1/sqrt(H), 1/sqrt(H))."""
    params = []
    k = 1.0 / float(hidden_dim) ** 0.5
    in_d = input_dim
    for _ in range(num_layers):
        key, k1, k2, k3, k4 = jax.random.split(key, 5)
        params.append({
            "w_ih": jax.random.uniform(k1, (4 * hidden_dim, in_d), dtype, -k, k),
            "w_hh": jax.random.uniform(k2, (4 * hidden_dim, hidden_dim), dtype, -k, k),
            "b_ih": jax.random.uniform(k3, (4 * hidden_dim,), dtype, -k, k),
            "b_hh": jax.random.uniform(k4, (4 * hidden_dim,), dtype, -k, k),
        })
        in_d = hidden_dim
    return params


def pack_stacked_lstm_params(params, input_dim, hidden_dim):
    """Pack per-layer PyTorch-layout LSTMCell weights for the fused kernel.

    Returns:
      w_q    : (L, 2*Hp, 4*Hp) int8 -- stacked [W_ih^T ; W_hh^T] per layer
               (layer 0's W_ih rows are zero: its input path is precomputed),
               gate columns reordered to (i, f, o, g), padded to Hp lanes,
               symmetric per-output-column int8 quantization.
      w_scale: (L, 1, 4*Hp) f32     -- per-column dequant scales.
      b_all  : (L, 1, 4*Hp) f32     -- b_ih + b_hh, same column layout.
      w_in0  : (input_dim, 4*Hp) f32-- layer-0 W_ih^T for the wrapper-side
               input projection (full precision; one small matmul).
    """
    L = len(params)
    H = hidden_dim
    Hp = _round_up(H, 128)
    Kp = 2 * Hp
    G = 4 * Hp

    def reorder_pad_cols(mat):
        # (rows, 4H) PyTorch gate order (i,f,g,o) -> (rows, 4Hp) order (i,f,o,g)
        i, f, g, o = jnp.split(mat, 4, axis=-1)
        pad = lambda m: jnp.pad(m, ((0, 0), (0, Hp - H)))
        return jnp.concatenate([pad(i), pad(f), pad(o), pad(g)], axis=-1)

    w_stack, b_stack = [], []
    for l, p in enumerate(params):
        w_l = jnp.zeros((Kp, G), jnp.float32)
        if l > 0:  # layers >= 1: input is the previous layer's h (dim H)
            w_ih_t = jnp.transpose(p["w_ih"]).astype(jnp.float32)      # (H, 4H)
            w_l = w_l.at[:H, :].set(reorder_pad_cols(w_ih_t))
        w_hh_t = jnp.transpose(p["w_hh"]).astype(jnp.float32)          # (H, 4H)
        w_l = w_l.at[Hp:Hp + H, :].set(reorder_pad_cols(w_hh_t))
        b = (p["b_ih"] + p["b_hh"]).astype(jnp.float32)[None, :]       # (1, 4H)
        w_stack.append(w_l)
        b_stack.append(reorder_pad_cols(b))

    w_all = jnp.stack(w_stack)                                          # (L, Kp, G)
    # Symmetric per-output-column int8 quantization (weight-only).
    max_abs = jnp.max(jnp.abs(w_all), axis=1, keepdims=True)            # (L, 1, G)
    w_scale = jnp.where(max_abs > 0.0, max_abs / 127.0, 1.0)
    w_q = jnp.clip(jnp.round(w_all / w_scale), -127.0, 127.0).astype(jnp.int8)

    b_all = jnp.stack(b_stack)                                           # (L, 1, G)
    w_in0 = reorder_pad_cols(jnp.transpose(params[0]["w_ih"]).astype(jnp.float32))
    return w_q, w_scale, b_all, w_in0


@jax.jit
def stacked_lstm_forward(rnn_inputs, hidden_states, w_q, w_scale, b_all, w_in0):
    """Forward pass matching StackedLSTM.forward (dropout = identity)."""
    h_0, c_0 = hidden_states
    L, B, H = h_0.shape
    Hp = b_all.shape[-1] // 4
    Bp = _round_up(B, 8)

    # Layer-0 input projection precomputed in f32 (one small matmul), so the
    # fused per-layer weight carries no zero-padded input_dim rows.
    xg0 = rnn_inputs.astype(jnp.float32) @ w_in0                  # (B, 4*Hp)
    xg0_pad = jnp.zeros((Bp, 4 * Hp), jnp.float32).at[:B].set(xg0)

    # Zero-filled padding + zero weight rows / bias columns keep every padded
    # gate/state lane exactly zero inside the kernel.
    h0_pad = jnp.zeros((L, Bp, Hp), jnp.bfloat16).at[:, :B, :H].set(
        h_0.astype(jnp.bfloat16))
    c0_pad = jnp.zeros((L, Bp, Hp), jnp.float32).at[:, :B, :H].set(
        c_0.astype(jnp.float32))

    h1_pad, c1_pad = _stacked_lstm_pallas(xg0_pad, h0_pad, c0_pad,
                                          w_q, w_scale, b_all)

    h_1 = h1_pad[:, :B, :H].astype(rnn_inputs.dtype)
    c_1 = c1_pad[:, :B, :H].astype(rnn_inputs.dtype)
    return h_1[-1], (h_1, c_1)


def _reference_forward(rnn_inputs, hidden_states, params):
    """Pure-JAX f32 reference (PyTorch LSTMCell semantics, dropout=identity)."""
    h_0, c_0 = hidden_states
    H = h_0.shape[-1]
    x = rnn_inputs
    h_1, c_1 = [], []
    for i, p in enumerate(params):
        gates = x @ p["w_ih"].T + h_0[i] @ p["w_hh"].T + p["b_ih"] + p["b_hh"]
        ig = jax.nn.sigmoid(gates[:, 0 * H:1 * H])
        fg = jax.nn.sigmoid(gates[:, 1 * H:2 * H])
        gg = jnp.tanh(gates[:, 2 * H:3 * H])
        og = jax.nn.sigmoid(gates[:, 3 * H:4 * H])
        c_i = fg * c_0[i] + ig * gg
        h_i = og * jnp.tanh(c_i)
        x = h_i
        h_1.append(h_i)
        c_1.append(c_i)
    return x, (jnp.stack(h_1), jnp.stack(c_1))


if __name__ == "__main__":
    num_layers = 3
    batch = 2
    input_dim = 16
    hidden_dim = 32

    key = jax.random.PRNGKey(0)
    key, kx, kh, kc, kp = jax.random.split(key, 5)

    rnn_inputs = jax.random.normal(kx, (batch, input_dim), jnp.float32)
    h_0 = jax.random.normal(kh, (num_layers, batch, hidden_dim), jnp.float32)
    c_0 = jax.random.normal(kc, (num_layers, batch, hidden_dim), jnp.float32)

    params = init_stacked_lstm_params(kp, num_layers, input_dim, hidden_dim)
    w_q, w_scale, b_all, w_in0 = pack_stacked_lstm_params(
        params, input_dim, hidden_dim)

    out, (h_1, c_1) = stacked_lstm_forward(
        rnn_inputs, (h_0, c_0), w_q, w_scale, b_all, w_in0)
    jax.block_until_ready((out, h_1, c_1))

    # Correctness check vs. pure-JAX f32 reference.  Kernel uses int8 weights
    # (per-column scales) with bf16 MXU / f32 accumulation and bf16 h-state
    # I/O, so tolerance reflects quantized-weight forward accuracy.
    ref_out, (ref_h, ref_c) = _reference_forward(rnn_inputs, (h_0, c_0), params)
    assert out.shape == (batch, hidden_dim)
    assert h_1.shape == (num_layers, batch, hidden_dim)
    assert c_1.shape == (num_layers, batch, hidden_dim)
    assert jnp.allclose(out, ref_out, atol=3e-2, rtol=2e-2), "output mismatch"
    assert jnp.allclose(h_1, ref_h, atol=3e-2, rtol=2e-2), "h_1 mismatch"
    assert jnp.allclose(c_1, ref_c, atol=3e-2, rtol=2e-2), "c_1 mismatch"

    print("KERNEL_OK")
</pallas_src>

<mosaic_0001>
module attributes {stable_mosaic.version = 11 : i64} {
  func.func @_stacked_lstm_kernel(%arg0: i32, %arg1: i32, %arg2: memref<8x512xf32, #tpu.memory_space<vmem>>, %arg3: memref<1x8x128xbf16, #tpu.memory_space<vmem>>, %arg4: memref<1x8x128xf32, #tpu.memory_space<vmem>>, %arg5: memref<1x256x512xi8, #tpu.memory_space<vmem>>, %arg6: memref<1x1x512xf32, #tpu.memory_space<vmem>>, %arg7: memref<1x1x512xf32, #tpu.memory_space<vmem>>, %arg8: memref<1x8x128xbf16, #tpu.memory_space<vmem>>, %arg9: memref<1x8x128xf32, #tpu.memory_space<vmem>>, %arg10: memref<8x256xbf16, #tpu.memory_space<vmem>>, %arg11: memref<8x512xf32, #tpu.memory_space<vmem>>) attributes {dimension_semantics = [#tpu.dimension_semantics<arbitrary>, #tpu.dimension_semantics<arbitrary>], iteration_bounds = array<i64: 3, 1>, scalar_prefetch = 0 : i64, scratch_operands = 2 : i64, tpu.core_type = #tpu.core_type<tc>, window_params = [{pipeline_mode = #tpu.pipeline_mode<synchronous>, transform_indices = @transform_0, window_bounds = array<i64: 8, 512>}, {transform_indices = @transform_1, window_bounds = array<i64: 1, 8, 128>}, {transform_indices = @transform_2, window_bounds = array<i64: 1, 8, 128>}, {transform_indices = @transform_3, window_bounds = array<i64: 1, 256, 512>}, {transform_indices = @transform_4, window_bounds = array<i64: 1, 1, 512>}, {transform_indices = @transform_5, window_bounds = array<i64: 1, 1, 512>}, {transform_indices = @transform_6, window_bounds = array<i64: 1, 8, 128>}, {transform_indices = @transform_7, window_bounds = array<i64: 1, 8, 128>}]} {
    %c0_i32 = arith.constant 0 : i32
    %0 = arith.cmpi eq, %arg0, %c0_i32 : i32
    %c0_i32_0 = arith.constant 0 : i32
    %1 = arith.cmpi eq, %arg1, %c0_i32_0 : i32
    %2 = arith.andi %0, %1 : i1
    %3 = arith.extui %2 : i1 to i32
    %c0_i32_1 = arith.constant 0 : i32
    %4 = arith.cmpi ne, %3, %c0_i32_1 : i32
    scf.if %4 {
      %cst_13 = arith.constant 0.000000e+00 : bf16
      %23 = vector.broadcast %cst_13 : bf16 to vector<8x128xbf16>
      %c0_14 = arith.constant 0 : index
      %c0_15 = arith.constant 0 : index
      %24 = vector.load %arg10[%c0_14, %c0_15] : memref<8x256xbf16, #tpu.memory_space<vmem>>, vector<8x128xbf16>
      tpu.vector_store %arg10[%c0_14, %c0_15], %23 {strides = array<i32>} : memref<8x256xbf16, #tpu.memory_space<vmem>>, vector<8x128xbf16>,
    } else {
    }
    %c0_i32_2 = arith.constant 0 : i32
    %5 = arith.cmpi eq, %arg1, %c0_i32_2 : i32
    %6 = arith.extui %5 : i1 to i32
    %c0_i32_3 = arith.constant 0 : i32
    %7 = arith.cmpi ne, %6, %c0_i32_3 : i32
    scf.if %7 {
      %c0_13 = arith.constant 0 : index
      %c0_14 = arith.constant 0 : index
      %c0_15 = arith.constant 0 : index
      %23 = vector.load %arg3[%c0_13, %c0_14, %c0_15] : memref<1x8x128xbf16, #tpu.memory_space<vmem>>, vector<1x8x128xbf16>
      %24 = vector.shape_cast %23 : vector<1x8x128xbf16> to vector<8x128xbf16>
      %c0_16 = arith.constant 0 : index
      %c128 = arith.constant 128 : index
      %25 = vector.load %arg10[%c0_16, %c128] : memref<8x256xbf16, #tpu.memory_space<vmem>>, vector<8x128xbf16>
      tpu.vector_store %arg10[%c0_16, %c128], %24 {strides = array<i32>} : memref<8x256xbf16, #tpu.memory_space<vmem>>, vector<8x128xbf16>,
      %cst_17 = arith.constant 0.000000e+00 : f32
      %26 = vector.broadcast %cst_17 : f32 to vector<8x512xf32>
      %c0_18 = arith.constant 0 : index
      %c0_19 = arith.constant 0 : index
      %27 = vector.load %arg11[%c0_18, %c0_19] : memref<8x512xf32, #tpu.memory_space<vmem>>, vector<8x512xf32>
      tpu.vector_store %arg11[%c0_18, %c0_19], %26 {strides = array<i32>} : memref<8x512xf32, #tpu.memory_space<vmem>>, vector<8x512xf32>,
    } else {
    }
    %c256_i32 = arith.constant 256 : i32
    %8 = arith.muli %arg1, %c256_i32 : i32
    %9 = tpu.assume_multiple %8, 128 : i32
    %c0 = arith.constant 0 : index
    %c0_4 = arith.constant 0 : index
    %c0_5 = arith.constant 0 : index
    %10 = vector.load %arg5[%c0, %c0_4, %c0_5] : memref<1x256x512xi8, #tpu.memory_space<vmem>>, vector<1x256x512xi8>
    %11 = vector.shape_cast %10 : vector<1x256x512xi8> to vector<256x512xi8>
    %12 = arith.sitofp %11 : vector<256x512xi8> to vector<256x512xf32>
    %13 = arith.truncf %12 : vector<256x512xf32> to vector<256x512xbf16>
    %c0_6 = arith.constant 0 : index
    %c0_7 = arith.constant 0 : index
    %14 = vector.load %arg11[%c0_6, %c0_7] : memref<8x512xf32, #tpu.memory_space<vmem>>, vector<8x512xf32>
    %c0_8 = arith.constant 0 : index
    %15 = arith.index_cast %9 : i32 to index
    %16 = vector.load %arg10[%c0_8, %15] : memref<8x256xbf16, #tpu.memory_space<vmem>>, vector<8x256xbf16>
    %cst = arith.constant dense<0.000000e+00> : vector<8x512xf32>
    %17 = tpu.matmul %16, %13, %cst {dimension_numbers = #tpu.dot_dimension_numbers<[1], [0], [0], [1], [0, 0, 1, 1], [], []>} : vector<8x256xbf16>, vector<256x512xbf16>, vector<8x512xf32> -> vector<8x512xf32>
    %18 = arith.addf %14, %17 : vector<8x512xf32>
    %c0_9 = arith.constant 0 : index
    %c0_10 = arith.constant 0 : index
    %19 = vector.load %arg11[%c0_9, %c0_10] : memref<8x512xf32, #tpu.memory_space<vmem>>, vector<8x512xf32>
    tpu.vector_store %arg11[%c0_9, %c0_10], %18 {strides = array<i32>} : memref<8x512xf32, #tpu.memory_space<vmem>>, vector<8x512xf32>,
    %c0_i32_11 = arith.constant 0 : i32
    %20 = arith.cmpi eq, %arg1, %c0_i32_11 : i32
    %21 = arith.extui %20 : i1 to i32
    %c0_i32_12 = arith.constant 0 : i32
    %22 = arith.cmpi ne, %21, %c0_i32_12 : i32
    scf.if %22 {
      %c0_i32_13 = arith.constant 0 : i32
      %23 = arith.cmpi eq, %arg0, %c0_i32_13 : i32
      %24 = arith.extui %23 : i1 to i32
      %25 = arith.sitofp %24 : i32 to f32
      %c0_14 = arith.constant 0 : index
      %c0_15 = arith.constant 0 : index
      %26 = vector.load %arg11[%c0_14, %c0_15] : memref<8x512xf32, #tpu.memory_space<vmem>>, vector<8x512xf32>
      %c0_16 = arith.constant 0 : index
      %c0_17 = arith.constant 0 : index
      %c0_18 = arith.constant 0 : index
      %27 = vector.load %arg6[%c0_16, %c0_17, %c0_18] : memref<1x1x512xf32, #tpu.memory_space<vmem>>, vector<1x1x512xf32>
      %28 = vector.shape_cast %27 : vector<1x1x512xf32> to vector<1x512xf32>
      %29 = vector.broadcast %28 : vector<1x512xf32> to vector<8x512xf32>
      %30 = arith.mulf %26, %29 : vector<8x512xf32>
      %c0_19 = arith.constant 0 : index
      %c0_20 = arith.constant 0 : index
      %c0_21 = arith.constant 0 : index
      %31 = vector.load %arg7[%c0_19, %c0_20, %c0_21] : memref<1x1x512xf32, #tpu.memory_space<vmem>>, vector<1x1x512xf32>
      %32 = vector.shape_cast %31 : vector<1x1x512xf32> to vector<1x512xf32>
      %33 = vector.broadcast %32 : vector<1x512xf32> to vector<8x512xf32>
      %34 = arith.addf %30, %33 : vector<8x512xf32>
      %c0_22 = arith.constant 0 : index
      %c0_23 = arith.constant 0 : index
      %35 = vector.load %arg2[%c0_22, %c0_23] : memref<8x512xf32, #tpu.memory_space<vmem>>, vector<8x512xf32>
      %36 = vector.broadcast %25 : f32 to vector<8x512xf32>
      %37 = arith.mulf %36, %35 : vector<8x512xf32>
      %38 = arith.addf %34, %37 : vector<8x512xf32>
      %39 = vector.extract_strided_slice %38 {offsets = [0, 0], sizes = [8, 384], strides = [1, 1]} : vector<8x512xf32> to vector<8x384xf32>
      %40 = arith.negf %39 : vector<8x384xf32>
      %41 = math.exp %40 : vector<8x384xf32>
      %cst_24 = arith.constant 1.000000e+00 : f32
      %42 = vector.broadcast %cst_24 : f32 to vector<8x384xf32>
      %43 = arith.addf %42, %41 : vector<8x384xf32>
      %44 = arith.divf %42, %43 : vector<8x384xf32>
      %45 = vector.extract_strided_slice %38 {offsets = [0, 384], sizes = [8, 128], strides = [1, 1]} : vector<8x512xf32> to vector<8x128xf32>
      %46 = math.tanh %45 : vector<8x128xf32>
      %47 = vector.extract_strided_slice %44 {offsets = [0, 0], sizes = [8, 128], strides = [1, 1]} : vector<8x384xf32> to vector<8x128xf32>
      %48 = vector.extract_strided_slice %44 {offsets = [0, 128], sizes = [8, 128], strides = [1, 1]} : vector<8x384xf32> to vector<8x128xf32>
      %49 = vector.extract_strided_slice %44 {offsets = [0, 256], sizes = [8, 128], strides = [1, 1]} : vector<8x384xf32> to vector<8x128xf32>
      %c0_25 = arith.constant 0 : index
      %c0_26 = arith.constant 0 : index
      %c0_27 = arith.constant 0 : index
      %50 = vector.load %arg4[%c0_25, %c0_26, %c0_27] : memref<1x8x128xf32, #tpu.memory_space<vmem>>, vector<1x8x128xf32>
      %51 = vector.shape_cast %50 : vector<1x8x128xf32> to vector<8x128xf32>
      %52 = arith.mulf %48, %51 : vector<8x128xf32>
      %53 = arith.mulf %47, %46 : vector<8x128xf32>
      %54 = arith.addf %52, %53 : vector<8x128xf32>
      %55 = math.tanh %54 : vector<8x128xf32>
      %56 = arith.mulf %49, %55 : vector<8x128xf32>
      %57 = arith.truncf %56 : vector<8x128xf32> to vector<8x128xbf16>
      %c0_28 = arith.constant 0 : index
      %c0_29 = arith.constant 0 : index
      %c0_30 = arith.constant 0 : index
      %58 = vector.load %arg8[%c0_28, %c0_29, %c0_30] : memref<1x8x128xbf16, #tpu.memory_space<vmem>>, vector<1x8x128xbf16>
      %59 = vector.shape_cast %58 : vector<1x8x128xbf16> to vector<8x128xbf16>
      %60 = vector.shape_cast %57 : vector<8x128xbf16> to vector<1x8x128xbf16>
      tpu.vector_store %arg8[%c0_28, %c0_29, %c0_30], %60 {strides = array<i32>} : memref<1x8x128xbf16, #tpu.memory_space<vmem>>, vector<1x8x128xbf16>,
      %c0_31 = arith.constant 0 : index
      %c0_32 = arith.constant 0 : index
      %c0_33 = arith.constant 0 : index
      %61 = vector.load %arg9[%c0_31, %c0_32, %c0_33] : memref<1x8x128xf32, #tpu.memory_space<vmem>>, vector<1x8x128xf32>
      %62 = vector.shape_cast %61 : vector<1x8x128xf32> to vector<8x128xf32>
      %63 = vector.shape_cast %54 : vector<8x128xf32> to vector<1x8x128xf32>
      tpu.vector_store %arg9[%c0_31, %c0_32, %c0_33], %63 {strides = array<i32>} : memref<1x8x128xf32, #tpu.memory_space<vmem>>, vector<1x8x128xf32>,
      %64 = arith.truncf %56 : vector<8x128xf32> to vector<8x128xbf16>
      %c0_34 = arith.constant 0 : index
      %c0_35 = arith.constant 0 : index
      %65 = vector.load %arg10[%c0_34, %c0_35] : memref<8x256xbf16, #tpu.memory_space<vmem>>, vector<8x128xbf16>
      tpu.vector_store %arg10[%c0_34, %c0_35], %64 {strides = array<i32>} : memref<8x256xbf16, #tpu.memory_space<vmem>>, vector<8x128xbf16>,
    } else {
    }
    return
  }
  func.func @transform_0(%arg0: i32, %arg1: i32) -> (i32, i32) {
    %c0_i32 = arith.constant 0 : i32
    %c0_i32_0 = arith.constant 0 : i32
    %c0_i32_1 = arith.constant 0 : i32
    return %c0_i32, %c0_i32_0 : i32, i32
  }
  func.func @transform_1(%arg0: i32, %arg1: i32) -> (i32, i32, i32) {
    %c0_i32 = arith.constant 0 : i32
    %c0_i32_0 = arith.constant 0 : i32
    %c0_i32_1 = arith.constant 0 : i32
    return %arg0, %c0_i32, %c0_i32_0 : i32, i32, i32
  }
  func.func @transform_2(%arg0: i32, %arg1: i32) -> (i32, i32, i32) {
    %c0_i32 = arith.constant 0 : i32
    %c0_i32_0 = arith.constant 0 : i32
    %c0_i32_1 = arith.constant 0 : i32
    return %arg0, %c0_i32, %c0_i32_0 : i32, i32, i32
  }
  func.func @transform_3(%arg0: i32, %arg1: i32) -> (i32, i32, i32) {
    %c0_i32 = arith.constant 0 : i32
    %c0_i32_0 = arith.constant 0 : i32
    return %arg0, %arg1, %c0_i32 : i32, i32, i32
  }
  func.func @transform_4(%arg0: i32, %arg1: i32) -> (i32, i32, i32) {
    %c0_i32 = arith.constant 0 : i32
    %c0_i32_0 = arith.constant 0 : i32
    %c0_i32_1 = arith.constant 0 : i32
    return %arg0, %c0_i32, %c0_i32_0 : i32, i32, i32
  }
  func.func @transform_5(%arg0: i32, %arg1: i32) -> (i32, i32, i32) {
    %c0_i32 = arith.constant 0 : i32
    %c0_i32_0 = arith.constant 0 : i32
    %c0_i32_1 = arith.constant 0 : i32
    return %arg0, %c0_i32, %c0_i32_0 : i32, i32, i32
  }
  func.func @transform_6(%arg0: i32, %arg1: i32) -> (i32, i32, i32) {
    %c0_i32 = arith.constant 0 : i32
    %c0_i32_0 = arith.constant 0 : i32
    %c0_i32_1 = arith.constant 0 : i32
    return %arg0, %c0_i32, %c0_i32_0 : i32, i32, i32
  }
  func.func @transform_7(%arg0: i32, %arg1: i32) -> (i32, i32, i32) {
    %c0_i32 = arith.constant 0 : i32
    %c0_i32_0 = arith.constant 0 : i32
    %c0_i32_1 = arith.constant 0 : i32
    return %arg0, %c0_i32, %c0_i32_0 : i32, i32, i32
  }
}

</mosaic_0001>

<llo_original>
// kernel: stacked_lstm_forward.1
$region0: #{stacked_lstm_forward.1}
  #allocation0 [shape = 'u32[]', space=smem, size = 0x4, offset = 0x4, fixed_abs, tag = 'smem constant byte address 0x4 - core index']
  #allocation1 [shape = 'u32[72,128]{1,0:T(1,128)}', space=vmem, size = 0x9000, scoped, tag = 'internal scratch']
  #allocation2 [shape = 'bf16[8,256]{1,0:T(8,128)(2,1)}', space=vmem, size = 0x1000, scoped, tag = 'scratch operand']
  #allocation3 [shape = 'f32[8,512]{1,0:T(8,128)}', space=vmem, size = 0x4000, scoped, tag = 'scratch operand']
  %s0 = inlined_call_operand.vmem [shape: f32[8,512], index: 0, kind: input, shape index: {}]
  %s1 = inlined_call_operand.vmem [shape: bf16[3,8,128], index: 1, kind: input, shape index: {}]
  %s2 = inlined_call_operand.vmem [shape: f32[3,8,128], index: 2, kind: input, shape index: {}]
  %s3 = inlined_call_operand.hbm [shape: s8[3,256,512], index: 3, kind: input, shape index: {}]
  %s4 = inlined_call_operand.vmem [shape: f32[3,1,512], index: 4, kind: input, shape index: {}]
  %s5 = inlined_call_operand.vmem [shape: f32[3,1,512], index: 5, kind: input, shape index: {}]
  %s6 = inlined_call_operand.vmem [shape: bf16[3,8,128], index: 6, kind: output, shape index: {0}]
  %s7 = inlined_call_operand.vmem [shape: f32[3,8,128], index: 7, kind: output, shape index: {1}]
  %8 = xla_tuple %s6, %s7
  %s9 = sld [smem:[#allocation0]]
  $region81: #{stacked_lstm_forward.1} parent=0
    _
  %s11 = ssub.s32 1, %s9
  %s12 = scalar_select 0, %s11, %s9
  $region1: #{stacked_lstm_forward.1} parent=0
    #allocation4 [shape = 'u8[262144]{0}', space=vmem, size = 0x40000, scoped, tag = 'input window, operand 3']
    #allocation5 [shape = 's32[2]{0}', space=sflag, size = 0x8, scoped, tag = 'scoped memory for stacked_lstm_forward.1']
    %13 = vsyncpa [#allocation5], 0
    %s14 = scalar_lea.sflag [#allocation5], 1
    %15 = vsyncpa %s14, 0
    loop: start=0, step=1, limit=5
    $region2: #{stacked_lstm_forward.1} parent=1 // loop_pre_header
      _
    $region3: #{stacked_lstm_forward.1} parent=1 // loop_header
      %s17 = sphi 0, %s21
      %p18 = scmp.ge.s32.totalorder %s17, 5
      %s24 = sphi 0, %s36
      %s25 = sphi 0, %s32
      %s26 = sphi 0, %s24
      %s27 = sphi 0, %s25
      %s28 = sphi 0, %s26
      %s29 = sphi 0, %s27
      %s37 = sphi 0, %s37
      %s39 = sphi 0, %s37
      %s40 = sphi 0, %s39
      %s54 = sphi 0, %s40
      %s60 = sphi 0, %s62
      %s63 = sphi 0, %s60
      %s64 = sphi 0, %s63
      %s80 = sphi 0, %s64
      %s86 = sphi 0, %s88
      %s89 = sphi 0, %s86
      %s90 = sphi 0, %s89
      %s106 = sphi 0, %s90
      %s114 = sphi 0, %s116
      %s117 = sphi 0, %s114
      %s118 = sphi 0, %s117
      %s134 = sphi 0, %s118
      %s140 = sphi 0, %s142
      %s143 = sphi 0, %s140
      %s144 = sphi 0, %s143
      %s160 = sphi 0, %s144
      %s166 = sphi 0, %s168
      %s169 = sphi 0, %s166
      %s170 = sphi 0, %s169
      %s186 = sphi 0, %s170
      %s192 = sphi 0, %s194
      %s195 = sphi 0, %s192
      %s196 = sphi 0, %s195
      %s212 = sphi 0, %s196
      %s218 = sphi 0, %s220
      %s221 = sphi 0, %s218
      %s222 = sphi 0, %s221
      %s238 = sphi 0, %s222
    $region4: #{stacked_lstm_forward.1} parent=1 // loop_header_branch
      %20 = sbr.rel (%p18) target = $region8
    $region5: #{stacked_lstm_forward.1} parent=1 // loop_body
      %s22 = ssub.s32 %s17, 1
      %s23 = ssub.s32 %s17, 2
      %s30 = sadd.s32 1, %s25
      %p31 = scmp.ge.s32.totalorder %s30, 1
      %s32 = scalar_select %p31, 0, %s30
      %s33 = sadd.s32 1, %s24
      %s34 = scalar_select %p31, %s33, %s24
      %p35 = scmp.ge.s32.totalorder %s34, 3
      %s36 = scalar_select %p35, 0, %s34
      %s38 = sadd.s32 %s37, 1
      %p41 = scmp.eq.s32.totalorder %s17, 2
      %p42 = scmp.ne.s32.totalorder %s37, %s39
      %p43 = scmp.eq.s32.totalorder %s17, 0
      %p44 = por %p42, %p43
      %p45 = scmp.ne.s32.totalorder %s37, %s39
      %p46 = scmp.eq.s32.totalorder %s22, 2
      %p47 = por %p45, %p46
      %p48 = scmp.ne.s32.totalorder %s39, %s40
      %p49 = scmp.eq.s32.totalorder %s22, 0
      %p50 = por %p48, %p49
      %p51 = scmp.ne.s32.totalorder %s39, %s40
      %p52 = scmp.eq.s32.totalorder %s23, 2
      %p53 = por %p51, %p52
      %p55 = scmp.ne.s32.totalorder %s40, %s54
      %p56 = scmp.eq.s32.totalorder %s23, 0
      %p57 = por %p55, %p56
      %s58 = ssub.s32 %s24, %s36
      %p59 = scmp.eq.s32.totalorder %s58, 0
      %s61 = sadd.s32 %s60, 1
      %s62 = scalar_select %p59, %s60, %s61
      %p65 = pneg %p59
      %p66 = scmp.eq.s32.totalorder %s17, 2
      %p67 = por %p65, %p66
      %p68 = scmp.ne.s32.totalorder %s60, %s63
      %p69 = scmp.eq.s32.totalorder %s17, 0
      %p70 = por %p68, %p69
      %p71 = scmp.ne.s32.totalorder %s60, %s63
      %p72 = scmp.eq.s32.totalorder %s22, 2
      %p73 = por %p71, %p72
      %p74 = scmp.ne.s32.totalorder %s63, %s64
      %p75 = scmp.eq.s32.totalorder %s22, 0
      %p76 = por %p74, %p75
      %p77 = scmp.ne.s32.totalorder %s63, %s64
      %p78 = scmp.eq.s32.totalorder %s23, 2
      %p79 = por %p77, %p78
      %p81 = scmp.ne.s32.totalorder %s64, %s80
      %p82 = scmp.eq.s32.totalorder %s23, 0
      %p83 = por %p81, %p82
      %s84 = ssub.s32 %s24, %s36
      %p85 = scmp.eq.s32.totalorder %s84, 0
      %s87 = sadd.s32 %s86, 1
      %s88 = scalar_select %p85, %s86, %s87
      %p91 = pneg %p85
      %p92 = scmp.eq.s32.totalorder %s17, 2
      %p93 = por %p91, %p92
      %p94 = scmp.ne.s32.totalorder %s86, %s89
      %p95 = scmp.eq.s32.totalorder %s17, 0
      %p96 = por %p94, %p95
      %p97 = scmp.ne.s32.totalorder %s86, %s89
      %p98 = scmp.eq.s32.totalorder %s22, 2
      %p99 = por %p97, %p98
      %p100 = scmp.ne.s32.totalorder %s89, %s90
      %p101 = scmp.eq.s32.totalorder %s22, 0
      %p102 = por %p100, %p101
      %p103 = scmp.ne.s32.totalorder %s89, %s90
      %p104 = scmp.eq.s32.totalorder %s23, 2
      %p105 = por %p103, %p104
      %p107 = scmp.ne.s32.totalorder %s90, %s106
      %p108 = scmp.eq.s32.totalorder %s23, 0
      %p109 = por %p107, %p108
      %s110 = ssub.s32 %s24, %s36
      %s111 = ssub.s32 %s25, %s32
      %s112 = sor.u32 %s110, %s111
      %p113 = scmp.eq.s32.totalorder %s112, 0
      %s115 = sadd.s32 %s114, 1
      %s116 = scalar_select %p113, %s114, %s115
      %p119 = pneg %p113
      %p120 = scmp.eq.s32.totalorder %s17, 2
      %p121 = por %p119, %p120
      %p122 = scmp.ne.s32.totalorder %s114, %s117
      %p123 = scmp.eq.s32.totalorder %s17, 0
      %p124 = por %p122, %p123
      %p125 = scmp.ne.s32.totalorder %s114, %s117
      %p126 = scmp.eq.s32.totalorder %s22, 2
      %p127 = por %p125, %p126
      %p128 = scmp.ne.s32.totalorder %s117, %s118
      %p129 = scmp.eq.s32.totalorder %s22, 0
      %p130 = por %p128, %p129
      %p131 = scmp.ne.s32.totalorder %s117, %s118
      %p132 = scmp.eq.s32.totalorder %s23, 2
      %p133 = por %p131, %p132
      %p135 = scmp.ne.s32.totalorder %s118, %s134
      %p136 = scmp.eq.s32.totalorder %s23, 0
      %p137 = por %p135, %p136
      %s138 = ssub.s32 %s24, %s36
      %p139 = scmp.eq.s32.totalorder %s138, 0
      %s141 = sadd.s32 %s140, 1
      %s142 = scalar_select %p139, %s140, %s141
      %p145 = pneg %p139
      %p146 = scmp.eq.s32.totalorder %s17, 2
      %p147 = por %p145, %p146
      %p148 = scmp.ne.s32.totalorder %s140, %s143
      %p149 = scmp.eq.s32.totalorder %s17, 0
      %p150 = por %p148, %p149
      %p151 = scmp.ne.s32.totalorder %s140, %s143
      %p152 = scmp.eq.s32.totalorder %s22, 2
      %p153 = por %p151, %p152
      %p154 = scmp.ne.s32.totalorder %s143, %s144
      %p155 = scmp.eq.s32.totalorder %s22, 0
      %p156 = por %p154, %p155
      %p157 = scmp.ne.s32.totalorder %s143, %s144
      %p158 = scmp.eq.s32.totalorder %s23, 2
      %p159 = por %p157, %p158
      %p161 = scmp.ne.s32.totalorder %s144, %s160
      %p162 = scmp.eq.s32.totalorder %s23, 0
      %p163 = por %p161, %p162
      %s164 = ssub.s32 %s24, %s36
      %p165 = scmp.eq.s32.totalorder %s164, 0
      %s167 = sadd.s32 %s166, 1
      %s168 = scalar_select %p165, %s166, %s167
      %p171 = pneg %p165
      %p172 = scmp.eq.s32.totalorder %s17, 2
      %p173 = por %p171, %p172
      %p174 = scmp.ne.s32.totalorder %s166, %s169
      %p175 = scmp.eq.s32.totalorder %s17, 0
      %p176 = por %p174, %p175
      %p177 = scmp.ne.s32.totalorder %s166, %s169
      %p178 = scmp.eq.s32.totalorder %s22, 2
      %p179 = por %p177, %p178
      %p180 = scmp.ne.s32.totalorder %s169, %s170
      %p181 = scmp.eq.s32.totalorder %s22, 0
      %p182 = por %p180, %p181
      %p183 = scmp.ne.s32.totalorder %s169, %s170
      %p184 = scmp.eq.s32.totalorder %s23, 2
      %p185 = por %p183, %p184
      %p187 = scmp.ne.s32.totalorder %s170, %s186
      %p188 = scmp.eq.s32.totalorder %s23, 0
      %p189 = por %p187, %p188
      %s190 = ssub.s32 %s24, %s36
      %p191 = scmp.eq.s32.totalorder %s190, 0
      %s193 = sadd.s32 %s192, 1
      %s194 = scalar_select %p191, %s192, %s193
      %p197 = pneg %p191
      %p198 = scmp.eq.s32.totalorder %s17, 2
      %p199 = por %p197, %p198
      %p200 = scmp.ne.s32.totalorder %s192, %s195
      %p201 = scmp.eq.s32.totalorder %s17, 0
      %p202 = por %p200, %p201
      %p203 = scmp.ne.s32.totalorder %s192, %s195
      %p204 = scmp.eq.s32.totalorder %s22, 2
      %p205 = por %p203, %p204
      %p206 = scmp.ne.s32.totalorder %s195, %s196
      %p207 = scmp.eq.s32.totalorder %s22, 0
      %p208 = por %p206, %p207
      %p209 = scmp.ne.s32.totalorder %s195, %s196
      %p210 = scmp.eq.s32.totalorder %s23, 2
      %p211 = por %p209, %p210
      %p213 = scmp.ne.s32.totalorder %s196, %s212
      %p214 = scmp.eq.s32.totalorder %s23, 0
      %p215 = por %p213, %p214
      %s216 = ssub.s32 %s24, %s36
      %p217 = scmp.eq.s32.totalorder %s216, 0
      %s219 = sadd.s32 %s218, 1
      %s220 = scalar_select %p217, %s218, %s219
      %p223 = pneg %p217
      %p224 = scmp.eq.s32.totalorder %s17, 2
      %p225 = por %p223, %p224
      %p226 = scmp.ne.s32.totalorder %s218, %s221
      %p227 = scmp.eq.s32.totalorder %s17, 0
      %p228 = por %p226, %p227
      %p229 = scmp.ne.s32.totalorder %s218, %s221
      %p230 = scmp.eq.s32.totalorder %s22, 2
      %p231 = por %p229, %p230
      %p232 = scmp.ne.s32.totalorder %s221, %s222
      %p233 = scmp.eq.s32.totalorder %s22, 0
      %p234 = por %p232, %p233
      %p235 = scmp.ne.s32.totalorder %s221, %s222
      %p236 = scmp.eq.s32.totalorder %s23, 2
      %p237 = por %p235, %p236
      %p239 = scmp.ne.s32.totalorder %s222, %s238
      %p240 = scmp.eq.s32.totalorder %s23, 0
      %p241 = por %p239, %p240
      %p242 = scmp.le.s32.totalorder 1, %s17
      %p243 = scmp.lt.s32.totalorder %s17, 4
      %p244 = pnand %p242, %p243
      %p245 = pneg %p244
      // Predicated region
      $region9: #{stacked_lstm_forward.1} parent=5 // pred_check
        _
      $region10: #{stacked_lstm_forward.1} parent=5 // pred_check_branch
        %247 = sbr.rel (%p244) target = $region12
      $region11: #{stacked_lstm_forward.1} parent=5 // pred_region
        %s248 = ssub.s32 %s17, 1
        // Predicated region
        $region13: #{stacked_lstm_forward.1} parent=11 // pred_check
          %p249 = pneg %p50
        $region14: #{stacked_lstm_forward.1} parent=11 // pred_check_branch
          %251 = sbr.rel (%p249) target = $region16
        $region15: #{stacked_lstm_forward.1} parent=11 // pred_region
          _
        $region16: #{stacked_lstm_forward.1} parent=11 // pred_fallthru
          _
      $region12: #{stacked_lstm_forward.1} parent=5 // pred_fallthru
        _
      %p252 = scmp.lt.s32.totalorder %s17, 3
      // Predicated region
      $region17: #{stacked_lstm_forward.1} parent=5 // pred_check
        %p253 = pneg %p252
      $region18: #{stacked_lstm_forward.1} parent=5 // pred_check_branch
        %255 = sbr.rel (%p253) target = $region20
      $region19: #{stacked_lstm_forward.1} parent=5 // pred_region
        // Predicated region
        $region21: #{stacked_lstm_forward.1} parent=19 // pred_check
          %p256 = pneg %p70
        $region22: #{stacked_lstm_forward.1} parent=19 // pred_check_branch
          %258 = sbr.rel (%p256) target = $region24
        $region23: #{stacked_lstm_forward.1} parent=19 // pred_region
          %p259 = scmp.lt.s32.totalorder %s24, 2
          %s260 = scalar_select %p259, %s24, 2
          %s261 = smul.addr %s260, 4
          %s262 = scalar_lea.vmem %s1, %s261
        $region24: #{stacked_lstm_forward.1} parent=19 // pred_fallthru
          _
        // Predicated region
        $region25: #{stacked_lstm_forward.1} parent=19 // pred_check
          %p263 = pneg %p96
        $region26: #{stacked_lstm_forward.1} parent=19 // pred_check_branch
          %265 = sbr.rel (%p263) target = $region28
        $region27: #{stacked_lstm_forward.1} parent=19 // pred_region
          %p266 = scmp.lt.s32.totalorder %s24, 2
          %s267 = scalar_select %p266, %s24, 2
          %s268 = smul.addr %s267, 8
          %s269 = scalar_lea.vmem %s2, %s268
        $region28: #{stacked_lstm_forward.1} parent=19 // pred_fallthru
          _
        // Predicated region
        $region29: #{stacked_lstm_forward.1} parent=19 // pred_check
          %p270 = pneg %p124
        $region30: #{stacked_lstm_forward.1} parent=19 // pred_check_branch
          %272 = sbr.rel (%p270) target = $region32
        $region31: #{stacked_lstm_forward.1} parent=19 // pred_region
          %s273 = sand.u32 %s114, 1
          %s274 = scalar_lea.sflag [#allocation5], %s273
          %s275 = sand.u32 %s114, 1
          %s276 = smul.addr %s275, 256
          %s277 = scalar_lea.vmem [#allocation4], %s276
          %s278 = smul.u32 8, %s25
          %280 = vsyncadd %s274, 0
          %s281 = smul.addr %s278, 4
          %s282 = smul.addr %s24, 32
          %s283 = sadd.s32 %s281, %s282
          %s284 = smul.addr %s283, 8
          %s285 = scalar_lea.hbm %s3, %s284
          %s286 = sshll.u32 %s285, 4
          %s287 = int_to_ptr.hbm [resolvable:$true] %s286
          %s288 = sshll.u32 %s277, 4
          %s289 = int_to_ptr.vmem [resolvable:$true] %s288
          %294 = dma.hbm_to_vmem [thread:$0]  %s287, 4096, %s289, %s274, 512, 512, 32
        $region32: #{stacked_lstm_forward.1} parent=19 // pred_fallthru
          _
        // Predicated region
        $region33: #{stacked_lstm_forward.1} parent=19 // pred_check
          %p295 = pneg %p150
        $region34: #{stacked_lstm_forward.1} parent=19 // pred_check_branch
          %297 = sbr.rel (%p295) target = $region36
        $region35: #{stacked_lstm_forward.1} parent=19 // pred_region
          %p298 = scmp.lt.s32.totalorder %s24, 2
          %s299 = scalar_select %p298, %s24, 2
          %s300 = smul.addr %s299, 4
          %s301 = scalar_lea.vmem %s4, %s300
        $region36: #{stacked_lstm_forward.1} parent=19 // pred_fallthru
          _
        // Predicated region
        $region37: #{stacked_lstm_forward.1} parent=19 // pred_check
          %p302 = pneg %p176
        $region38: #{stacked_lstm_forward.1} parent=19 // pred_check_branch
          %304 = sbr.rel (%p302) target = $region40
        $region39: #{stacked_lstm_forward.1} parent=19 // pred_region
          %p305 = scmp.lt.s32.totalorder %s24, 2
          %s306 = scalar_select %p305, %s24, 2
          %s307 = smul.addr %s306, 4
          %s308 = scalar_lea.vmem %s5, %s307
        $region40: #{stacked_lstm_forward.1} parent=19 // pred_fallthru
          _
      $region20: #{stacked_lstm_forward.1} parent=5 // pred_fallthru
        _
      %p309 = scmp.le.s32.totalorder 1, %s17
      %p310 = scmp.lt.s32.totalorder %s17, 4
      %p311 = pnand %p309, %p310
      %p312 = pneg %p311
      // Predicated region
      $region41: #{stacked_lstm_forward.1} parent=5 // pred_check
        _
      $region42: #{stacked_lstm_forward.1} parent=5 // pred_check_branch
        %314 = sbr.rel (%p311) target = $region44
      $region43: #{stacked_lstm_forward.1} parent=5 // pred_region
        %s315 = ssub.s32 %s17, 1
        %s316 = sand.u32 %s117, 1
        %s317 = scalar_lea.sflag [#allocation5], %s316
        %s318 = sand.u32 %s117, 1
        %s319 = smul.addr %s318, 256
        %s320 = scalar_lea.vmem [#allocation4], %s319
        // Predicated region
        $region45: #{stacked_lstm_forward.1} parent=43 // pred_check
          %p321 = pneg %p130
        $region46: #{stacked_lstm_forward.1} parent=43 // pred_check_branch
          %323 = sbr.rel (%p321) target = $region48
        $region47: #{stacked_lstm_forward.1} parent=43 // pred_region
          %325 = dma.done %s317, 4096
        $region48: #{stacked_lstm_forward.1} parent=43 // pred_fallthru
          _
        %p326 = pneg %p50
        %p327 = pneg %p47
        %p328 = scmp.lt.s32.totalorder %s26, 2
        %s329 = scalar_select %p328, %s26, 2
        %s330 = smul.addr %s329, 4
        %s331 = scalar_lea.vmem %s1, %s330
        %p332 = pneg %p76
        %p333 = pneg %p73
        %p334 = scmp.lt.s32.totalorder %s26, 2
        %s335 = scalar_select %p334, %s26, 2
        %s336 = smul.addr %s335, 8
        %s337 = scalar_lea.vmem %s2, %s336
        %p338 = pneg %p102
        %p339 = pneg %p99
        %s340 = sand.u32 %s117, 1
        %s341 = scalar_lea.sflag [#allocation5], %s340
        %s342 = sand.u32 %s117, 1
        %s343 = smul.addr %s342, 256
        %s344 = scalar_lea.vmem [#allocation4], %s343
        %p345 = pneg %p130
        %p346 = pneg %p127
        %p347 = scmp.lt.s32.totalorder %s26, 2
        %s348 = scalar_select %p347, %s26, 2
        %s349 = smul.addr %s348, 4
        %s350 = scalar_lea.vmem %s4, %s349
        %p351 = pneg %p156
        %p352 = pneg %p153
        %p353 = scmp.lt.s32.totalorder %s26, 2
        %s354 = scalar_select %p353, %s26, 2
        %s355 = smul.addr %s354, 4
        %s356 = scalar_lea.vmem %s5, %s355
        %p357 = pneg %p182
        %p358 = pneg %p179
        %p359 = pneg %p208
        %p360 = pneg %p205
        %p361 = scmp.lt.s32.totalorder %s26, 2
        %s362 = scalar_select %p361, %s26, 2
        %s363 = smul.addr %s362, 4
        %s364 = scalar_lea.vmem %s6, %s363
        %p365 = pneg %p234
        %p366 = pneg %p231
        %p367 = scmp.lt.s32.totalorder %s26, 2
        %s368 = scalar_select %p367, %s26, 2
        %s369 = smul.addr %s368, 8
        %s370 = scalar_lea.vmem %s7, %s369
        %p371 = scmp.lt.s32.totalorder %s26, 2
        %s372 = scalar_select %p371, %s26, 2
        %s373 = smul.addr %s372, 4
        %s374 = scalar_lea.vmem %s1, %s373
        %p375 = scmp.lt.s32.totalorder %s26, 2
        %s376 = scalar_select %p375, %s26, 2
        %s377 = smul.addr %s376, 8
        %s378 = scalar_lea.vmem %s2, %s377
        %s379 = smul.u32 8, %s27
        %p380 = scmp.lt.s32.totalorder %s26, 2
        %s381 = scalar_select %p380, %s26, 2
        %s382 = smul.addr %s381, 4
        %s383 = scalar_lea.vmem %s4, %s382
        %p384 = scmp.lt.s32.totalorder %s26, 2
        %s385 = scalar_select %p384, %s26, 2
        %s386 = smul.addr %s385, 4
        %s387 = scalar_lea.vmem %s5, %s386
        %p388 = scmp.lt.s32.totalorder %s26, 2
        %s389 = scalar_select %p388, %s26, 2
        %s390 = smul.addr %s389, 4
        %s391 = scalar_lea.vmem %s6, %s390
        %p392 = scmp.lt.s32.totalorder %s26, 2
        %s393 = scalar_select %p392, %s26, 2
        %s394 = smul.addr %s393, 8
        %s395 = scalar_lea.vmem %s7, %s394
        %p397 = scmp.eq.s32.totalorder %s26, 0
        %p398 = scmp.eq.s32.totalorder %s27, 0
        %p399 = pnand %p397, %p398
        %p400 = pneg %p399
        // Predicated region
        $region49: #{stacked_lstm_forward.1} parent=43 // pred_check
          _
        $region50: #{stacked_lstm_forward.1} parent=43 // pred_check_branch
          %402 = sbr.rel (%p399) target = $region52
        $region51: #{stacked_lstm_forward.1} parent=43 // pred_region
          %403 = vst [vmem:[#allocation2] sm:$0xf] 0
        $region52: #{stacked_lstm_forward.1} parent=43 // pred_fallthru
          _
        // Predicated region
        $region53: #{stacked_lstm_forward.1} parent=43 // pred_check
          %p404 = pneg %p398
        $region54: #{stacked_lstm_forward.1} parent=43 // pred_check_branch
          %406 = sbr.rel (%p404) target = $region56
        $region55: #{stacked_lstm_forward.1} parent=43 // pred_region
          %v407 = vld [vmem:[%s374] sm:$0xf]
          %408 = vst [vmem:[#allocation2 + $0x4] sm:$0xf] %v407
          %409 = vst [vmem:[#allocation3] sm:$0xff] 0.0
          %410 = vst [vmem:[#allocation3 + $0x8] sm:$0xff] 0.0
          %411 = vst [vmem:[#allocation3 + $0x10] sm:$0xff] 0.0
          %412 = vst [vmem:[#allocation3 + $0x18] sm:$0xff] 0.0
        $region56: #{stacked_lstm_forward.1} parent=43 // pred_fallthru
          _
        %s413 = smul.u32 %s27, 256
        %v414 = vld [vmem:[%s320] sm:$0xff]
        %v415 = vld [vmem:[%s320 + $0x8] sm:$0xff]
        %v416 = vld [vmem:[%s320 + $0x10] sm:$0xff]
        %v417 = vld [vmem:[%s320 + $0x18] sm:$0xff]
        %v418 = vld [vmem:[%s320 + $0x20] sm:$0xff]
        %v419 = vld [vmem:[%s320 + $0x28] sm:$0xff]
        %v420 = vld [vmem:[%s320 + $0x30] sm:$0xff]
        %v421 = vld [vmem:[%s320 + $0x38] sm:$0xff]
        %v422 = vld [vmem:[%s320 + $0x40] sm:$0xff]
        %v423 = vld [vmem:[%s320 + $0x48] sm:$0xff]
        %v424 = vld [vmem:[%s320 + $0x50] sm:$0xff]
        %v425 = vld [vmem:[%s320 + $0x58] sm:$0xff]
        %v426 = vld [vmem:[%s320 + $0x60] sm:$0xff]
        %v427 = vld [vmem:[%s320 + $0x68] sm:$0xff]
        %v428 = vld [vmem:[%s320 + $0x70] sm:$0xff]
        %v429 = vld [vmem:[%s320 + $0x78] sm:$0xff]
        %v430 = vld [vmem:[%s320 + $0x80] sm:$0xff]
        %v431 = vld [vmem:[%s320 + $0x88] sm:$0xff]
        %v432 = vld [vmem:[%s320 + $0x90] sm:$0xff]
        %v433 = vld [vmem:[%s320 + $0x98] sm:$0xff]
        %v434 = vld [vmem:[%s320 + $0xa0] sm:$0xff]
        %v435 = vld [vmem:[%s320 + $0xa8] sm:$0xff]
        %v436 = vld [vmem:[%s320 + $0xb0] sm:$0xff]
        %v437 = vld [vmem:[%s320 + $0xb8] sm:$0xff]
        %v438 = vld [vmem:[%s320 + $0xc0] sm:$0xff]
        %v439 = vld [vmem:[%s320 + $0xc8] sm:$0xff]
        %v440 = vld [vmem:[%s320 + $0xd0] sm:$0xff]
        %v441 = vld [vmem:[%s320 + $0xd8] sm:$0xff]
        %v442 = vld [vmem:[%s320 + $0xe0] sm:$0xff]
        %v443 = vld [vmem:[%s320 + $0xe8] sm:$0xff]
        %v444 = vld [vmem:[%s320 + $0xf0] sm:$0xff]
        %v445 = vld [vmem:[%s320 + $0xf8] sm:$0xff]
        %v446 = vunpack.c.0.s8 %v414
        %v447 = vunpack.c.0.s8 %v415
        %v448 = vunpack.c.0.s8 %v416
        %v449 = vunpack.c.0.s8 %v417
        %v450 = vunpack.c.1.s8 %v414
        %v451 = vunpack.c.1.s8 %v415
        %v452 = vunpack.c.1.s8 %v416
        %v453 = vunpack.c.1.s8 %v417
        %v454 = vunpack.c.2.s8 %v414
        %v455 = vunpack.c.2.s8 %v415
        %v456 = vunpack.c.2.s8 %v416
        %v457 = vunpack.c.2.s8 %v417
        %v458 = vunpack.c.3.s8 %v414
        %v459 = vunpack.c.3.s8 %v415
        %v460 = vunpack.c.3.s8 %v416
        %v461 = vunpack.c.3.s8 %v417
        %v462 = vunpack.c.0.s8 %v418
        %v463 = vunpack.c.0.s8 %v419
        %v464 = vunpack.c.0.s8 %v420
        %v465 = vunpack.c.0.s8 %v421
        %v466 = vunpack.c.1.s8 %v418
        %v467 = vunpack.c.1.s8 %v419
        %v468 = vunpack.c.1.s8 %v420
        %v469 = vunpack.c.1.s8 %v421
        %v470 = vunpack.c.2.s8 %v418
        %v471 = vunpack.c.2.s8 %v419
        %v472 = vunpack.c.2.s8 %v420
        %v473 = vunpack.c.2.s8 %v421
        %v474 = vunpack.c.3.s8 %v418
        %v475 = vunpack.c.3.s8 %v419
        %v476 = vunpack.c.3.s8 %v420
        %v477 = vunpack.c.3.s8 %v421
        %v478 = vunpack.c.0.s8 %v422
        %v479 = vunpack.c.0.s8 %v423
        %v480 = vunpack.c.0.s8 %v424
        %v481 = vunpack.c.0.s8 %v425
        %v482 = vunpack.c.1.s8 %v422
        %v483 = vunpack.c.1.s8 %v423
        %v484 = vunpack.c.1.s8 %v424
        %v485 = vunpack.c.1.s8 %v425
        %v486 = vunpack.c.2.s8 %v422
        %v487 = vunpack.c.2.s8 %v423
        %v488 = vunpack.c.2.s8 %v424
        %v489 = vunpack.c.2.s8 %v425
        %v490 = vunpack.c.3.s8 %v422
        %v491 = vunpack.c.3.s8 %v423
        %v492 = vunpack.c.3.s8 %v424
        %v493 = vunpack.c.3.s8 %v425
        %v494 = vunpack.c.0.s8 %v426
        %v495 = vunpack.c.0.s8 %v427
        %v496 = vunpack.c.0.s8 %v428
        %v497 = vunpack.c.0.s8 %v429
        %v498 = vunpack.c.1.s8 %v426
        %v499 = vunpack.c.1.s8 %v427
        %v500 = vunpack.c.1.s8 %v428
        %v501 = vunpack.c.1.s8 %v429
        %v502 = vunpack.c.2.s8 %v426
        %v503 = vunpack.c.2.s8 %v427
        %v504 = vunpack.c.2.s8 %v428
        %v505 = vunpack.c.2.s8 %v429
        %v506 = vunpack.c.3.s8 %v426
        %v507 = vunpack.c.3.s8 %v427
        %v508 = vunpack.c.3.s8 %v428
        %v509 = vunpack.c.3.s8 %v429
        %v510 = vunpack.c.0.s8 %v430
        %v511 = vunpack.c.0.s8 %v431
        %v512 = vunpack.c.0.s8 %v432
        %v513 = vunpack.c.0.s8 %v433
        %v514 = vunpack.c.1.s8 %v430
        %v515 = vunpack.c.1.s8 %v431
        %v516 = vunpack.c.1.s8 %v432
        %v517 = vunpack.c.1.s8 %v433
        %v518 = vunpack.c.2.s8 %v430
        %v519 = vunpack.c.2.s8 %v431
        %v520 = vunpack.c.2.s8 %v432
        %v521 = vunpack.c.2.s8 %v433
        %v522 = vunpack.c.3.s8 %v430
        %v523 = vunpack.c.3.s8 %v431
        %v524 = vunpack.c.3.s8 %v432
        %v525 = vunpack.c.3.s8 %v433
        %v526 = vunpack.c.0.s8 %v434
        %v527 = vunpack.c.0.s8 %v435
        %v528 = vunpack.c.0.s8 %v436
        %v529 = vunpack.c.0.s8 %v437
        %v530 = vunpack.c.1.s8 %v434
        %v531 = vunpack.c.1.s8 %v435
        %v532 = vunpack.c.1.s8 %v436
        %v533 = vunpack.c.1.s8 %v437
        %v534 = vunpack.c.2.s8 %v434
        %v535 = vunpack.c.2.s8 %v435
        %v536 = vunpack.c.2.s8 %v436
        %v537 = vunpack.c.2.s8 %v437
        %v538 = vunpack.c.3.s8 %v434
        %v539 = vunpack.c.3.s8 %v435
        %v540 = vunpack.c.3.s8 %v436
        %v541 = vunpack.c.3.s8 %v437
        %v542 = vunpack.c.0.s8 %v438
        %v543 = vunpack.c.0.s8 %v439
        %v544 = vunpack.c.0.s8 %v440
        %v545 = vunpack.c.0.s8 %v441
        %v546 = vunpack.c.1.s8 %v438
        %v547 = vunpack.c.1.s8 %v439
        %v548 = vunpack.c.1.s8 %v440
        %v549 = vunpack.c.1.s8 %v441
        %v550 = vunpack.c.2.s8 %v438
        %v551 = vunpack.c.2.s8 %v439
        %v552 = vunpack.c.2.s8 %v440
        %v553 = vunpack.c.2.s8 %v441
        %v554 = vunpack.c.3.s8 %v438
        %v555 = vunpack.c.3.s8 %v439
        %v556 = vunpack.c.3.s8 %v440
        %v557 = vunpack.c.3.s8 %v441
        %v558 = vunpack.c.0.s8 %v442
        %v559 = vunpack.c.0.s8 %v443
        %v560 = vunpack.c.0.s8 %v444
        %v561 = vunpack.c.0.s8 %v445
        %v562 = vunpack.c.1.s8 %v442
        %v563 = vunpack.c.1.s8 %v443
        %v564 = vunpack.c.1.s8 %v444
        %v565 = vunpack.c.1.s8 %v445
        %v566 = vunpack.c.2.s8 %v442
        %v567 = vunpack.c.2.s8 %v443
        %v568 = vunpack.c.2.s8 %v444
        %v569 = vunpack.c.2.s8 %v445
        %v570 = vunpack.c.3.s8 %v442
        %v571 = vunpack.c.3.s8 %v443
        %v572 = vunpack.c.3.s8 %v444
        %v573 = vunpack.c.3.s8 %v445
        %v574 = vcvt.s32.f32 %v446
        %v575 = vcvt.s32.f32 %v447
        %v576 = vcvt.s32.f32 %v448
        %v577 = vcvt.s32.f32 %v449
        %v578 = vcvt.s32.f32 %v450
        %v579 = vcvt.s32.f32 %v451
        %v580 = vcvt.s32.f32 %v452
        %v581 = vcvt.s32.f32 %v453
        %v582 = vcvt.s32.f32 %v454
        %v583 = vcvt.s32.f32 %v455
        %v584 = vcvt.s32.f32 %v456
        %v585 = vcvt.s32.f32 %v457
        %v586 = vcvt.s32.f32 %v458
        %v587 = vcvt.s32.f32 %v459
        %v588 = vcvt.s32.f32 %v460
        %v589 = vcvt.s32.f32 %v461
        %v590 = vcvt.s32.f32 %v462
        %v591 = vcvt.s32.f32 %v463
        %v592 = vcvt.s32.f32 %v464
        %v593 = vcvt.s32.f32 %v465
        %v594 = vcvt.s32.f32 %v466
        %v595 = vcvt.s32.f32 %v467
        %v596 = vcvt.s32.f32 %v468
        %v597 = vcvt.s32.f32 %v469
        %v598 = vcvt.s32.f32 %v470
        %v599 = vcvt.s32.f32 %v471
        %v600 = vcvt.s32.f32 %v472
        %v601 = vcvt.s32.f32 %v473
        %v602 = vcvt.s32.f32 %v474
        %v603 = vcvt.s32.f32 %v475
        %v604 = vcvt.s32.f32 %v476
        %v605 = vcvt.s32.f32 %v477
        %v606 = vcvt.s32.f32 %v478
        %v607 = vcvt.s32.f32 %v479
        %v608 = vcvt.s32.f32 %v480
        %v609 = vcvt.s32.f32 %v481
        %v610 = vcvt.s32.f32 %v482
        %v611 = vcvt.s32.f32 %v483
        %v612 = vcvt.s32.f32 %v484
        %v613 = vcvt.s32.f32 %v485
        %v614 = vcvt.s32.f32 %v486
        %v615 = vcvt.s32.f32 %v487
        %v616 = vcvt.s32.f32 %v488
        %v617 = vcvt.s32.f32 %v489
        %v618 = vcvt.s32.f32 %v490
        %v619 = vcvt.s32.f32 %v491
        %v620 = vcvt.s32.f32 %v492
        %v621 = vcvt.s32.f32 %v493
        %v622 = vcvt.s32.f32 %v494
        %v623 = vcvt.s32.f32 %v495
        %v624 = vcvt.s32.f32 %v496
        %v625 = vcvt.s32.f32 %v497
        %v626 = vcvt.s32.f32 %v498
        %v627 = vcvt.s32.f32 %v499
        %v628 = vcvt.s32.f32 %v500
        %v629 = vcvt.s32.f32 %v501
        %v630 = vcvt.s32.f32 %v502
        %v631 = vcvt.s32.f32 %v503
        %v632 = vcvt.s32.f32 %v504
        %v633 = vcvt.s32.f32 %v505
        %v634 = vcvt.s32.f32 %v506
        %v635 = vcvt.s32.f32 %v507
        %v636 = vcvt.s32.f32 %v508
        %v637 = vcvt.s32.f32 %v509
        %v638 = vcvt.s32.f32 %v510
        %v639 = vcvt.s32.f32 %v511
        %v640 = vcvt.s32.f32 %v512
        %v641 = vcvt.s32.f32 %v513
        %v642 = vcvt.s32.f32 %v514
        %v643 = vcvt.s32.f32 %v515
        %v644 = vcvt.s32.f32 %v516
        %v645 = vcvt.s32.f32 %v517
        %v646 = vcvt.s32.f32 %v518
        %v647 = vcvt.s32.f32 %v519
        %v648 = vcvt.s32.f32 %v520
        %v649 = vcvt.s32.f32 %v521
        %v650 = vcvt.s32.f32 %v522
        %v651 = vcvt.s32.f32 %v523
        %v652 = vcvt.s32.f32 %v524
        %v653 = vcvt.s32.f32 %v525
        %v654 = vcvt.s32.f32 %v526
        %v655 = vcvt.s32.f32 %v527
        %v656 = vcvt.s32.f32 %v528
        %v657 = vcvt.s32.f32 %v529
        %v658 = vcvt.s32.f32 %v530
        %v659 = vcvt.s32.f32 %v531
        %v660 = vcvt.s32.f32 %v532
        %v661 = vcvt.s32.f32 %v533
        %v662 = vcvt.s32.f32 %v534
        %v663 = vcvt.s32.f32 %v535
        %v664 = vcvt.s32.f32 %v536
        %v665 = vcvt.s32.f32 %v537
        %v666 = vcvt.s32.f32 %v538
        %v667 = vcvt.s32.f32 %v539
        %v668 = vcvt.s32.f32 %v540
        %v669 = vcvt.s32.f32 %v541
        %v670 = vcvt.s32.f32 %v542
        %v671 = vcvt.s32.f32 %v543
        %v672 = vcvt.s32.f32 %v544
        %v673 = vcvt.s32.f32 %v545
        %v674 = vcvt.s32.f32 %v546
        %v675 = vcvt.s32.f32 %v547
        %v676 = vcvt.s32.f32 %v548
        %v677 = vcvt.s32.f32 %v549
        %v678 = vcvt.s32.f32 %v550
        %v679 = vcvt.s32.f32 %v551
        %v680 = vcvt.s32.f32 %v552
        %v681 = vcvt.s32.f32 %v553
        %v682 = vcvt.s32.f32 %v554
        %v683 = vcvt.s32.f32 %v555
        %v684 = vcvt.s32.f32 %v556
        %v685 = vcvt.s32.f32 %v557
        %v686 = vcvt.s32.f32 %v558
        %v687 = vcvt.s32.f32 %v559
        %v688 = vcvt.s32.f32 %v560
        %v689 = vcvt.s32.f32 %v561
        %v690 = vcvt.s32.f32 %v562
        %v691 = vcvt.s32.f32 %v563
        %v692 = vcvt.s32.f32 %v564
        %v693 = vcvt.s32.f32 %v565
        %v694 = vcvt.s32.f32 %v566
        %v695 = vcvt.s32.f32 %v567
        %v696 = vcvt.s32.f32 %v568
        %v697 = vcvt.s32.f32 %v569
        %v698 = vcvt.s32.f32 %v570
        %v699 = vcvt.s32.f32 %v571
        %v700 = vcvt.s32.f32 %v572
        %v701 = vcvt.s32.f32 %v573
        %v702 = vpack.c.bf16 %v578, %v574
        %v703 = vpack.c.bf16 %v579, %v575
        %v704 = vpack.c.bf16 %v580, %v576
        %v705 = vpack.c.bf16 %v581, %v577
        %v706 = vpack.c.bf16 %v586, %v582
        %v707 = vpack.c.bf16 %v587, %v583
        %v708 = vpack.c.bf16 %v588, %v584
        %v709 = vpack.c.bf16 %v589, %v585
        %v710 = vpack.c.bf16 %v594, %v590
        %v711 = vpack.c.bf16 %v595, %v591
        %v712 = vpack.c.bf16 %v596, %v592
        %v713 = vpack.c.bf16 %v597, %v593
        %v714 = vpack.c.bf16 %v602, %v598
        %v715 = vpack.c.bf16 %v603, %v599
        %v716 = vpack.c.bf16 %v604, %v600
        %v717 = vpack.c.bf16 %v605, %v601
        %v718 = vpack.c.bf16 %v610, %v606
        %v719 = vpack.c.bf16 %v611, %v607
        %v720 = vpack.c.bf16 %v612, %v608
        %v721 = vpack.c.bf16 %v613, %v609
        %v722 = vpack.c.bf16 %v618, %v614
        %v723 = vpack.c.bf16 %v619, %v615
        %v724 = vpack.c.bf16 %v620, %v616
        %v725 = vpack.c.bf16 %v621, %v617
        %v726 = vpack.c.bf16 %v626, %v622
        %v727 = vpack.c.bf16 %v627, %v623
        %v728 = vpack.c.bf16 %v628, %v624
        %v729 = vpack.c.bf16 %v629, %v625
        %v730 = vpack.c.bf16 %v634, %v630
        %v731 = vpack.c.bf16 %v635, %v631
        %v732 = vpack.c.bf16 %v636, %v632
        %v733 = vpack.c.bf16 %v637, %v633
        %v734 = vpack.c.bf16 %v642, %v638
        %v735 = vpack.c.bf16 %v643, %v639
        %v736 = vpack.c.bf16 %v644, %v640
        %v737 = vpack.c.bf16 %v645, %v641
        %v738 = vpack.c.bf16 %v650, %v646
        %v739 = vpack.c.bf16 %v651, %v647
        %v740 = vpack.c.bf16 %v652, %v648
        %v741 = vpack.c.bf16 %v653, %v649
        %v742 = vpack.c.bf16 %v658, %v654
        %v743 = vpack.c.bf16 %v659, %v655
        %v744 = vpack.c.bf16 %v660, %v656
        %v745 = vpack.c.bf16 %v661, %v657
        %v746 = vpack.c.bf16 %v666, %v662
        %v747 = vpack.c.bf16 %v667, %v663
        %v748 = vpack.c.bf16 %v668, %v664
        %v749 = vpack.c.bf16 %v669, %v665
        %v750 = vpack.c.bf16 %v674, %v670
        %v751 = vpack.c.bf16 %v675, %v671
        %v752 = vpack.c.bf16 %v676, %v672
        %v753 = vpack.c.bf16 %v677, %v673
        %v754 = vpack.c.bf16 %v682, %v678
        %v755 = vpack.c.bf16 %v683, %v679
        %v756 = vpack.c.bf16 %v684, %v680
        %v757 = vpack.c.bf16 %v685, %v681
        %v758 = vpack.c.bf16 %v690, %v686
        %v759 = vpack.c.bf16 %v691, %v687
        %v760 = vpack.c.bf16 %v692, %v688
        %v761 = vpack.c.bf16 %v693, %v689
        %v762 = vpack.c.bf16 %v698, %v694
        %v763 = vpack.c.bf16 %v699, %v695
        %v764 = vpack.c.bf16 %v700, %v696
        %v765 = vpack.c.bf16 %v701, %v697
        %v766 = vld [vmem:[#allocation3] sm:$0xff]
        %v767 = vld [vmem:[#allocation3 + $0x8] sm:$0xff]
        %v768 = vld [vmem:[#allocation3 + $0x10] sm:$0xff]
        %v769 = vld [vmem:[#allocation3 + $0x18] sm:$0xff]
        %s770 = sshra.s32 %s413, 7
        %s771 = sand.u32 %s413, 127
        %s772 = smul.addr %s770, 4
        %s773 = scalar_lea.vmem [#allocation2], %s772
        %v774 = vld [vmem:[%s773] sm:$0xff]
        %v776 = vunpack.c.l.b16 %v774
        %v777 = vunpack.c.h.b16 %v774
        %v778 = vpack.c.b16 %v776, %v776
        %v779 = vpack.c.b16 %v777, %v777
        %782 = vmatpush.bf16.msra.mxu0 %v730
        %783 = vmatpush.bf16.msra.mxu0 %v726
        %784 = vmatpush.bf16.msra.mxu0 %v722
        %785 = vmatpush.bf16.msra.mxu0 %v718
        %786 = vmatpush.bf16.msra.mxu0 %v714
        %787 = vmatpush.bf16.msra.mxu0 %v710
        %788 = vmatpush.bf16.msra.mxu0 %v706
        %789 = vmatpush.bf16.msra.mxu0 %v702
        %790 = vmatmul.bf16.gmra.mxu0 %v778
        %v791 = vpop.f32.mrf.mxu0
        %v792 = vadd.f32 0.0, %v791
        %v793 = vpop.f32.mrf.mxu0
        %794 = vdwg.mxu0
        %795 = vmatpush.bf16.msra.mxu0 %v762
        %796 = vmatpush.bf16.msra.mxu0 %v758
        %797 = vmatpush.bf16.msra.mxu0 %v754
        %798 = vmatpush.bf16.msra.mxu0 %v750
        %799 = vmatpush.bf16.msra.mxu0 %v746
        %800 = vmatpush.bf16.msra.mxu0 %v742
        %801 = vmatpush.bf16.msra.mxu0 %v738
        %802 = vmatpush.bf16.msra.mxu0 %v734
        %803 = vmatmul.bf16.gmra.mxu0 %v779
        %v804 = vpop.f32.mrf.mxu0
        %v805 = vadd.f32 %v792, %v804
        %v806 = vpop.f32.mrf.mxu0
        %807 = vdwg.mxu0
        %808 = vmatpush.bf16.msra.mxu0 %v731
        %809 = vmatpush.bf16.msra.mxu0 %v727
        %810 = vmatpush.bf16.msra.mxu0 %v723
        %811 = vmatpush.bf16.msra.mxu0 %v719
        %812 = vmatpush.bf16.msra.mxu0 %v715
        %813 = vmatpush.bf16.msra.mxu0 %v711
        %814 = vmatpush.bf16.msra.mxu0 %v707
        %815 = vmatpush.bf16.msra.mxu0 %v703
        %816 = vmatmul.bf16.gmra.mxu0 %v778
        %v817 = vpop.f32.mrf.mxu0
        %v818 = vadd.f32 0.0, %v817
        %v819 = vpop.f32.mrf.mxu0
        %820 = vdwg.mxu0
        %821 = vmatpush.bf16.msra.mxu0 %v763
        %822 = vmatpush.bf16.msra.mxu0 %v759
        %823 = vmatpush.bf16.msra.mxu0 %v755
        %824 = vmatpush.bf16.msra.mxu0 %v751
        %825 = vmatpush.bf16.msra.mxu0 %v747
        %826 = vmatpush.bf16.msra.mxu0 %v743
        %827 = vmatpush.bf16.msra.mxu0 %v739
        %828 = vmatpush.bf16.msra.mxu0 %v735
        %829 = vmatmul.bf16.gmra.mxu0 %v779
        %v830 = vpop.f32.mrf.mxu0
        %v831 = vadd.f32 %v818, %v830
        %v832 = vpop.f32.mrf.mxu0
        %833 = vdwg.mxu0
        %834 = vmatpush.bf16.msra.mxu0 %v732
        %835 = vmatpush.bf16.msra.mxu0 %v728
        %836 = vmatpush.bf16.msra.mxu0 %v724
        %837 = vmatpush.bf16.msra.mxu0 %v720
        %838 = vmatpush.bf16.msra.mxu0 %v716
        %839 = vmatpush.bf16.msra.mxu0 %v712
        %840 = vmatpush.bf16.msra.mxu0 %v708
        %841 = vmatpush.bf16.msra.mxu0 %v704
        %842 = vmatmul.bf16.gmra.mxu0 %v778
        %v843 = vpop.f32.mrf.mxu0
        %v844 = vadd.f32 0.0, %v843
        %v845 = vpop.f32.mrf.mxu0
        %846 = vdwg.mxu0
        %847 = vmatpush.bf16.msra.mxu0 %v764
        %848 = vmatpush.bf16.msra.mxu0 %v760
        %849 = vmatpush.bf16.msra.mxu0 %v756
        %850 = vmatpush.bf16.msra.mxu0 %v752
        %851 = vmatpush.bf16.msra.mxu0 %v748
        %852 = vmatpush.bf16.msra.mxu0 %v744
        %853 = vmatpush.bf16.msra.mxu0 %v740
        %854 = vmatpush.bf16.msra.mxu0 %v736
        %855 = vmatmul.bf16.gmra.mxu0 %v779
        %v856 = vpop.f32.mrf.mxu0
        %v857 = vadd.f32 %v844, %v856
        %v858 = vpop.f32.mrf.mxu0
        %859 = vdwg.mxu0
        %860 = vmatpush.bf16.msra.mxu0 %v733
        %861 = vmatpush.bf16.msra.mxu0 %v729
        %862 = vmatpush.bf16.msra.mxu0 %v725
        %863 = vmatpush.bf16.msra.mxu0 %v721
        %864 = vmatpush.bf16.msra.mxu0 %v717
        %865 = vmatpush.bf16.msra.mxu0 %v713
        %866 = vmatpush.bf16.msra.mxu0 %v709
        %867 = vmatpush.bf16.msra.mxu0 %v705
        %868 = vmatmul.bf16.gmra.mxu0 %v778
        %v869 = vpop.f32.mrf.mxu0
        %v870 = vadd.f32 0.0, %v869
        %v871 = vpop.f32.mrf.mxu0
        %872 = vdwg.mxu0
        %873 = vmatpush.bf16.msra.mxu0 %v765
        %874 = vmatpush.bf16.msra.mxu0 %v761
        %875 = vmatpush.bf16.msra.mxu0 %v757
        %876 = vmatpush.bf16.msra.mxu0 %v753
        %877 = vmatpush.bf16.msra.mxu0 %v749
        %878 = vmatpush.bf16.msra.mxu0 %v745
        %879 = vmatpush.bf16.msra.mxu0 %v741
        %880 = vmatpush.bf16.msra.mxu0 %v737
        %881 = vmatmul.bf16.gmra.mxu0 %v779
        %v882 = vpop.f32.mrf.mxu0
        %v883 = vadd.f32 %v870, %v882
        %v884 = vpop.f32.mrf.mxu0
        %885 = vdwg.mxu0
        %v886 = vadd.f32 %v766, %v805
        %v887 = vadd.f32 %v767, %v831
        %v888 = vadd.f32 %v768, %v857
        %v889 = vadd.f32 %v769, %v883
        %890 = vst [vmem:[#allocation3] sm:$0xff] %v886
        %891 = vst [vmem:[#allocation3 + $0x8] sm:$0xff] %v887
        %892 = vst [vmem:[#allocation3 + $0x10] sm:$0xff] %v888
        %893 = vst [vmem:[#allocation3 + $0x18] sm:$0xff] %v889
        // Predicated region
        $region57: #{stacked_lstm_forward.1} parent=43 // pred_check
          %p894 = pneg %p398
        $region58: #{stacked_lstm_forward.1} parent=43 // pred_check_branch
          %896 = sbr.rel (%p894) target = $region60
        $region59: #{stacked_lstm_forward.1} parent=43 // pred_region
          %s897 = scalar_select %p397, 1, 0
          %s898 = scvt.s32.f32 %s897
          %v899 = vld [vmem:[#allocation3] sm:$0xff]
          %v900 = vld [vmem:[#allocation3 + $0x8] sm:$0xff]
          %v901 = vld [vmem:[#allocation3 + $0x10] sm:$0xff]
          %v902 = vld [vmem:[#allocation3 + $0x18] sm:$0xff]
          %v903 = vld [vmem:[%s383] sm:$0xf]
          %v905 = vperm.slane %v903, 0
          %v906 = vperm.slane %v903, 1
          %v907 = vperm.slane %v903, 2
          %v908 = vperm.slane %v903, 3
          %v913 = vmul.f32 %v899, %v905
          %v914 = vmul.f32 %v900, %v906
          %v915 = vmul.f32 %v901, %v907
          %v916 = vmul.f32 %v902, %v908
          %v917 = vld [vmem:[%s387] sm:$0xf]
          %v919 = vperm.slane %v917, 0
          %v920 = vperm.slane %v917, 1
          %v921 = vperm.slane %v917, 2
          %v922 = vperm.slane %v917, 3
          %v927 = vadd.f32 %v913, %v919
          %v928 = vadd.f32 %v914, %v920
          %v929 = vadd.f32 %v915, %v921
          %v930 = vadd.f32 %v916, %v922
          %v931 = vld [vmem:[%s0] sm:$0xff]
          %v932 = vld [vmem:[%s0 + $0x8] sm:$0xff]
          %v933 = vld [vmem:[%s0 + $0x10] sm:$0xff]
          %v934 = vld [vmem:[%s0 + $0x18] sm:$0xff]
          %v935 = vstv %s898
          %v936 = vmul.f32 %v935, %v931
          %v937 = vmul.f32 %v935, %v932
          %v938 = vmul.f32 %v935, %v933
          %v939 = vmul.f32 %v935, %v934
          %v940 = vadd.f32 %v927, %v936
          %v941 = vadd.f32 %v928, %v937
          %v942 = vadd.f32 %v929, %v938
          %v943 = vadd.f32 %v930, %v939
          %v944 = vxor.u32 %v940, 2147483648
          %v945 = vxor.u32 %v941, 2147483648
          %v946 = vxor.u32 %v942, 2147483648
          %v947 = vmul.f32 %v944, 1.442695
          %v948 = vpow.pop %v947
          %v949 = vmul.f32 %v945, 1.442695
          %v950 = vpow.pop %v949
          %v951 = vmul.f32 %v946, 1.442695
          %v952 = vpow.pop %v951
          %v953 = vadd.f32 %v948, 1.0
          %v954 = vadd.f32 %v950, 1.0
          %v955 = vadd.f32 %v952, 1.0
          %v956 = vrcp.pop %v953
          %v957 = vmul.f32 %v953, %v956
          %v958 = vsub.f32 1.0, %v957
          %v959 = vmul.f32 %v956, %v958
          %v960 = vadd.f32 %v956, %v959
          %vm961 = vweird.f32 %v953
          %vm962 = vweird.f32 %v956
          %vm963 = vmor %vm961, %vm962
          %v964 = vsel %vm963, %v956, %v960
          %v965 = vand.u32 2147483647, %v953
          %vm966 = vcmp.eq.f32.partialorder %v965, 8.507059e+37
          %v967 = vand.u32 %v953, 2147483648
          %v968 = vor.u32 1.1754944e-38, %v967
          %v969 = vsel %vm966, %v968, %v964
          %v970 = vmul.f32 1.0, %v969
          %v971 = vrcp.pop %v954
          %v972 = vmul.f32 %v954, %v971
          %v973 = vsub.f32 1.0, %v972
          %v974 = vmul.f32 %v971, %v973
          %v975 = vadd.f32 %v971, %v974
          %vm976 = vweird.f32 %v954
          %vm977 = vweird.f32 %v971
          %vm978 = vmor %vm976, %vm977
          %v979 = vsel %vm978, %v971, %v975
          %v980 = vand.u32 2147483647, %v954
          %vm981 = vcmp.eq.f32.partialorder %v980, 8.507059e+37
          %v982 = vand.u32 %v954, 2147483648
          %v983 = vor.u32 1.1754944e-38, %v982
          %v984 = vsel %vm981, %v983, %v979
          %v985 = vmul.f32 1.0, %v984
          %v986 = vrcp.pop %v955
          %v987 = vmul.f32 %v955, %v986
          %v988 = vsub.f32 1.0, %v987
          %v989 = vmul.f32 %v986, %v988
          %v990 = vadd.f32 %v986, %v989
          %vm991 = vweird.f32 %v955
          %vm992 = vweird.f32 %v986
          %vm993 = vmor %vm991, %vm992
          %v994 = vsel %vm993, %v986, %v990
          %v995 = vand.u32 2147483647, %v955
          %vm996 = vcmp.eq.f32.partialorder %v995, 8.507059e+37
          %v997 = vand.u32 %v955, 2147483648
          %v998 = vor.u32 1.1754944e-38, %v997
          %v999 = vsel %vm996, %v998, %v994
          %v1000 = vmul.f32 1.0, %v999
          %v1001 = vtanh.pop %v943
          %v1002 = vld [vmem:[%s378] sm:$0xff]
          %v1003 = vmul.f32 %v985, %v1002
          %v1004 = vmul.f32 %v970, %v1001
          %v1005 = vadd.f32 %v1003, %v1004
          %v1006 = vtanh.pop %v1005
          %v1007 = vmul.f32 %v1000, %v1006
          %v1008 = vpack.c.bf16 %v1007, %v1007
          %1009 = vst [vmem:[%s391] sm:$0xf] %v1008
          %1010 = vst [vmem:[%s395] sm:$0xff] %v1005
          %1011 = vst [vmem:[#allocation2] sm:$0xf] %v1008
        $region60: #{stacked_lstm_forward.1} parent=43 // pred_fallthru
          _
        %p1012 = scmp.lt.s32.totalorder %s26, 2
        %s1013 = scalar_select %p1012, %s26, 2
        %s1014 = smul.addr %s1013, 4
        %s1015 = scalar_lea.vmem %s6, %s1014
        %p1016 = scmp.lt.s32.totalorder %s26, 2
        %s1017 = scalar_select %p1016, %s26, 2
        %s1018 = smul.addr %s1017, 8
        %s1019 = scalar_lea.vmem %s7, %s1018
        // Predicated region
        $region61: #{stacked_lstm_forward.1} parent=43 // pred_check
          %p1020 = pneg %p205
        $region62: #{stacked_lstm_forward.1} parent=43 // pred_check_branch
          %1022 = sbr.rel (%p1020) target = $region64
        $region63: #{stacked_lstm_forward.1} parent=43 // pred_region
          _
        $region64: #{stacked_lstm_forward.1} parent=43 // pred_fallthru
          _
        // Predicated region
        $region65: #{stacked_lstm_forward.1} parent=43 // pred_check
          %p1023 = pneg %p231
        $region66: #{stacked_lstm_forward.1} parent=43 // pred_check_branch
          %1025 = sbr.rel (%p1023) target = $region68
        $region67: #{stacked_lstm_forward.1} parent=43 // pred_region
          _
        $region68: #{stacked_lstm_forward.1} parent=43 // pred_fallthru
          _
      $region44: #{stacked_lstm_forward.1} parent=5 // pred_fallthru
        _
      %p1026 = scmp.le.s32.totalorder 2, %s17
      // Predicated region
      $region69: #{stacked_lstm_forward.1} parent=5 // pred_check
        %p1027 = pneg %p1026
      $region70: #{stacked_lstm_forward.1} parent=5 // pred_check_branch
        %1029 = sbr.rel (%p1027) target = $region72
      $region71: #{stacked_lstm_forward.1} parent=5 // pred_region
        %s1030 = ssub.s32 %s17, 2
        // Predicated region
        $region73: #{stacked_lstm_forward.1} parent=71 // pred_check
          %p1031 = pneg %p211
        $region74: #{stacked_lstm_forward.1} parent=71 // pred_check_branch
          %1033 = sbr.rel (%p1031) target = $region76
        $region75: #{stacked_lstm_forward.1} parent=71 // pred_region
          %p1034 = scmp.lt.s32.totalorder %s28, 2
          %s1035 = scalar_select %p1034, %s28, 2
          %s1036 = smul.addr %s1035, 4
          %s1037 = scalar_lea.vmem %s6, %s1036
        $region76: #{stacked_lstm_forward.1} parent=71 // pred_fallthru
          _
        // Predicated region
        $region77: #{stacked_lstm_forward.1} parent=71 // pred_check
          %p1038 = pneg %p237
        $region78: #{stacked_lstm_forward.1} parent=71 // pred_check_branch
          %1040 = sbr.rel (%p1038) target = $region80
        $region79: #{stacked_lstm_forward.1} parent=71 // pred_region
          %p1041 = scmp.lt.s32.totalorder %s28, 2
          %s1042 = scalar_select %p1041, %s28, 2
          %s1043 = smul.addr %s1042, 8
          %s1044 = scalar_lea.vmem %s7, %s1043
        $region80: #{stacked_lstm_forward.1} parent=71 // pred_fallthru
          _
      $region72: #{stacked_lstm_forward.1} parent=5 // pred_fallthru
        _
    $region6: #{stacked_lstm_forward.1} parent=1 // loop_footer
      %s21 = sadd.s32 1, %s17
    $region7: #{stacked_lstm_forward.1} parent=1 // loop_footer_branch
      %16 = sbr.rel target = $region3
    $region8: #{stacked_lstm_forward.1} parent=1 // loop_exit
      _
    %1045 = vsyncpa [#allocation5], 1
    %s1046 = scalar_lea.sflag [#allocation5], 1
    %1047 = vsyncpa %s1046, 1

</llo_original>
